<compile_context>
chip_gen: v5e
topology: v5e:2x2
jax: 0.10.0
libtpu: 0.0.40
codegen_flags: <defaults>
</compile_context>

<pallas_src>
import jax
import jax.numpy as jnp
from jax.experimental import pallas as pl
from jax.experimental.pallas import tpu as pltpu

EPSILON = 1e-4


def _round_up(x, q):
    return ((x + q - 1) // q) * q


def _vmem_capacity_bytes():
    """Physical VMEM per TensorCore; conservative fallback if the query fails."""
    try:
        return int(pltpu.get_tpu_info().vmem_capacity_bytes)
    except Exception:
        return 64 * 1024 * 1024  # v7x-sized fallback (safe everywhere)


def _make_kernel(compute_dtype):
    def kernel(w_ref, x0_ref, x1_ref, x2_ref, o_ref):
        # w_ref: (3,) float32 in SMEM.  Normalization is a few scalar-slot ops,
        # fully hidden under the block DMAs.
        w0 = w_ref[0]
        w1 = w_ref[1]
        w2 = w_ref[2]
        inv = 1.0 / (w0 + w1 + w2 + EPSILON)
        s0 = (w0 * inv).astype(compute_dtype)
        s1 = (w1 * inv).astype(compute_dtype)
        s2 = (w2 * inv).astype(compute_dtype)

        # x*_ref: (tn, tc, thw); o_ref: (tn, 3, tc, thw)
        o_ref[:, 0] = (s0 * x0_ref[...]).astype(o_ref.dtype)
        o_ref[:, 1] = (s1 * x1_ref[...]).astype(o_ref.dtype)
        o_ref[:, 2] = (s2 * x2_ref[...]).astype(o_ref.dtype)

    return kernel


def bifpn_concat3(w, x0, x1, x2):
    """Weighted fusion + concat along channel dim (NCHW, dim=1)."""
    assert x0.shape == x1.shape == x2.shape
    assert x0.dtype == x1.dtype == x2.dtype
    n, c, h, wd = x0.shape
    hw = h * wd
    dtype = x0.dtype
    itemsize = dtype.itemsize

    # Sublane quantum is dtype-aware: packed dtypes carry 2/4 rows per sublane.
    sub_q = {4: 8, 2: 16, 1: 32}.get(itemsize, 8)

    # Narrow multiply for 16-bit float inputs (bf16/f16 VALUs on v6e/v7x);
    # everything else computes in f32.  The kernel is HBM-bound either way.
    if dtype == jnp.bfloat16 or dtype == jnp.float16:
        compute_dtype = dtype
    else:
        compute_dtype = jnp.float32

    # Lane-dense flatten: NCHW -> [N, C, H*W] (contiguous, free reshape).
    x0f = x0.reshape(n, c, hw)
    x1f = x1.reshape(n, c, hw)
    x2f = x2.reshape(n, c, hw)

    # ---- Generation-aware block budget --------------------------------------
    # Live VMEM per grid step = 2 buffers x (3 input blocks + output block(=3x))
    # = 12x one input block; keep that under ~75% of physical VMEM.
    vmem_cap = _vmem_capacity_bytes()
    in_block_budget = max(64 * 1024, (vmem_cap * 3 // 4) // 12)
    budget_elems = max(128, in_block_budget // itemsize)

    # ---- Tile selection ------------------------------------------------------
    # Prefer a full-HW lane axis (one contiguous DMA per channel row); absorb
    # the remaining budget into C, then N.  Only split HW for huge feature maps.
    # Blocks do NOT need to divide the array dims (grid uses cdiv; ragged last
    # tiles are masked by Pallas).
    rows_if_full_hw = budget_elems // hw if hw <= budget_elems else 0
    if hw <= budget_elems and (c <= rows_if_full_hw or rows_if_full_hw >= sub_q):
        thw = hw
        if c <= rows_if_full_hw:
            tc = c
            tn = max(1, min(n, budget_elems // (c * hw)))
        else:
            tc = (rows_if_full_hw // sub_q) * sub_q
            tn = 1
    else:
        # Very large H*W: tile the lane axis in 128-multiples within budget.
        thw = min(_round_up(hw, 128),
                  max(128, (budget_elems // sub_q // 128) * 128))
        tc = min(c, sub_q)
        tn = 1

    # ---- Guarantee >= 2 grid steps (feeds both v7x TensorCores, enables
    # DMA/compute overlap even for tiny BiFPN levels). ------------------------
    if pl.cdiv(n, tn) * pl.cdiv(c, tc) * pl.cdiv(hw, thw) < 2:
        if n > 1:
            tn = -(-n // 2)
        elif c > sub_q:
            tc = _round_up(-(-c // 2), sub_q)
        elif hw > 128:
            thw = _round_up(-(-hw // 2), 128)

    grid = (pl.cdiv(n, tn), pl.cdiv(c, tc), pl.cdiv(hw, thw))

    in_blk = pl.BlockSpec((tn, tc, thw), lambda i, j, k: (i, j, k))
    out_blk = pl.BlockSpec((tn, 3, tc, thw), lambda i, j, k: (i, 0, j, k))

    # VMEM limit: double-buffered 3 input blocks + 1 output block (= 3x input),
    # with headroom, never exceeding physical VMEM (minus internal scratch).
    in_block_bytes = tn * tc * thw * itemsize
    vmem_needed = 2 * (3 + 3) * in_block_bytes
    vmem_limit = int(min(max(2 * vmem_needed, 32 * 1024 * 1024),
                         vmem_cap - 8 * 1024 * 1024))
    vmem_limit = int(max(vmem_limit, vmem_needed))

    out = pl.pallas_call(
        _make_kernel(compute_dtype),
        out_shape=jax.ShapeDtypeStruct((n, 3, c, hw), dtype),
        grid_spec=pltpu.PrefetchScalarGridSpec(
            num_scalar_prefetch=0,
            grid=grid,
            in_specs=[
                pl.BlockSpec(memory_space=pltpu.SMEM),  # fusion weights (3,)
                in_blk, in_blk, in_blk,
            ],
            out_specs=out_blk,
        ),
        compiler_params=pltpu.CompilerParams(
            dimension_semantics=("parallel", "parallel", "parallel"),
            vmem_limit_bytes=vmem_limit,
        ),
    )(w.astype(jnp.float32), x0f, x1f, x2f)

    # (N, 3, C, H*W) -> (N, 3C, H, W): contiguous reshape, free.
    return out.reshape(n, 3 * c, h, wd)


if __name__ == "__main__":
    key = jax.random.PRNGKey(0)
    k0, k1, k2 = jax.random.split(key, 3)

    N, C, H, W = 2, 4, 16, 16
    x0 = jax.random.normal(k0, (N, C, H, W), dtype=jnp.float32)
    x1 = jax.random.normal(k1, (N, C, H, W), dtype=jnp.float32)
    x2 = jax.random.normal(k2, (N, C, H, W), dtype=jnp.float32)

    # nn.Parameter(torch.ones(3)) -> deterministic ones init.
    w = jnp.ones((3,), dtype=jnp.float32)

    out = jax.block_until_ready(bifpn_concat3(w, x0, x1, x2))

    # Reference (pure JAX) for correctness.
    weight = w / (jnp.sum(w) + EPSILON)
    ref = jnp.concatenate(
        [weight[0] * x0, weight[1] * x1, weight[2] * x2], axis=1)

    assert out.shape == (N, 3 * C, H, W)
    assert jnp.allclose(out, ref, atol=1e-6, rtol=1e-5)
    print("KERNEL_OK")
</pallas_src>

<mosaic_0001>
module attributes {stable_mosaic.version = 11 : i64} {
  func.func @kernel(%arg0: i32, %arg1: i32, %arg2: i32, %arg3: memref<3xf32, #tpu.memory_space<smem>>, %arg4: memref<1x4x256xf32, #tpu.memory_space<vmem>>, %arg5: memref<1x4x256xf32, #tpu.memory_space<vmem>>, %arg6: memref<1x4x256xf32, #tpu.memory_space<vmem>>, %arg7: memref<1x3x4x256xf32, #tpu.memory_space<vmem>>) attributes {dimension_semantics = [#tpu.dimension_semantics<parallel>, #tpu.dimension_semantics<parallel>, #tpu.dimension_semantics<parallel>], iteration_bounds = array<i64: 2, 1, 1>, scalar_prefetch = 0 : i64, scratch_operands = 0 : i64, tpu.core_type = #tpu.core_type<tc>, window_params = [{transform_indices = @transform_0, window_bounds = array<i64: 3>}, {transform_indices = @transform_1, window_bounds = array<i64: 1, 4, 256>}, {transform_indices = @transform_2, window_bounds = array<i64: 1, 4, 256>}, {transform_indices = @transform_3, window_bounds = array<i64: 1, 4, 256>}, {transform_indices = @transform_4, window_bounds = array<i64: 1, 3, 4, 256>}]} {
    %c0 = arith.constant 0 : index
    %0 = memref.load %arg3[%c0] : memref<3xf32, #tpu.memory_space<smem>>
    %c1 = arith.constant 1 : index
    %1 = memref.load %arg3[%c1] : memref<3xf32, #tpu.memory_space<smem>>
    %c2 = arith.constant 2 : index
    %2 = memref.load %arg3[%c2] : memref<3xf32, #tpu.memory_space<smem>>
    %3 = arith.addf %0, %1 : f32
    %4 = arith.addf %3, %2 : f32
    %cst = arith.constant 9.99999974E-5 : f32
    %5 = arith.addf %4, %cst : f32
    %cst_0 = arith.constant 1.000000e+00 : f32
    %6 = arith.divf %cst_0, %5 : f32
    %7 = arith.mulf %0, %6 : f32
    %8 = arith.mulf %1, %6 : f32
    %9 = arith.mulf %2, %6 : f32
    %c0_1 = arith.constant 0 : index
    %c0_2 = arith.constant 0 : index
    %c0_3 = arith.constant 0 : index
    %10 = vector.load %arg4[%c0_1, %c0_2, %c0_3] : memref<1x4x256xf32, #tpu.memory_space<vmem>>, vector<1x4x256xf32>
    %11 = vector.broadcast %7 : f32 to vector<1x4x256xf32>
    %12 = arith.mulf %11, %10 : vector<1x4x256xf32>
    %c0_4 = arith.constant 0 : index
    %c0_5 = arith.constant 0 : index
    %c0_6 = arith.constant 0 : index
    %c0_7 = arith.constant 0 : index
    %13 = vector.load %arg7[%c0_4, %c0_5, %c0_6, %c0_7] : memref<1x3x4x256xf32, #tpu.memory_space<vmem>>, vector<1x1x4x256xf32>
    %14 = vector.shape_cast %13 : vector<1x1x4x256xf32> to vector<1x4x256xf32>
    %15 = vector.shape_cast %12 : vector<1x4x256xf32> to vector<1x1x4x256xf32>
    tpu.vector_store %arg7[%c0_4, %c0_5, %c0_6, %c0_7], %15 {strides = array<i32>} : memref<1x3x4x256xf32, #tpu.memory_space<vmem>>, vector<1x1x4x256xf32>,
    %c0_8 = arith.constant 0 : index
    %c0_9 = arith.constant 0 : index
    %c0_10 = arith.constant 0 : index
    %16 = vector.load %arg5[%c0_8, %c0_9, %c0_10] : memref<1x4x256xf32, #tpu.memory_space<vmem>>, vector<1x4x256xf32>
    %17 = vector.broadcast %8 : f32 to vector<1x4x256xf32>
    %18 = arith.mulf %17, %16 : vector<1x4x256xf32>
    %c0_11 = arith.constant 0 : index
    %c1_12 = arith.constant 1 : index
    %c0_13 = arith.constant 0 : index
    %c0_14 = arith.constant 0 : index
    %19 = vector.load %arg7[%c0_11, %c1_12, %c0_13, %c0_14] : memref<1x3x4x256xf32, #tpu.memory_space<vmem>>, vector<1x1x4x256xf32>
    %20 = vector.shape_cast %19 : vector<1x1x4x256xf32> to vector<1x4x256xf32>
    %21 = vector.shape_cast %18 : vector<1x4x256xf32> to vector<1x1x4x256xf32>
    tpu.vector_store %arg7[%c0_11, %c1_12, %c0_13, %c0_14], %21 {strides = array<i32>} : memref<1x3x4x256xf32, #tpu.memory_space<vmem>>, vector<1x1x4x256xf32>,
    %c0_15 = arith.constant 0 : index
    %c0_16 = arith.constant 0 : index
    %c0_17 = arith.constant 0 : index
    %22 = vector.load %arg6[%c0_15, %c0_16, %c0_17] : memref<1x4x256xf32, #tpu.memory_space<vmem>>, vector<1x4x256xf32>
    %23 = vector.broadcast %9 : f32 to vector<1x4x256xf32>
    %24 = arith.mulf %23, %22 : vector<1x4x256xf32>
    %c0_18 = arith.constant 0 : index
    %c2_19 = arith.constant 2 : index
    %c0_20 = arith.constant 0 : index
    %c0_21 = arith.constant 0 : index
    %25 = vector.load %arg7[%c0_18, %c2_19, %c0_20, %c0_21] : memref<1x3x4x256xf32, #tpu.memory_space<vmem>>, vector<1x1x4x256xf32>
    %26 = vector.shape_cast %25 : vector<1x1x4x256xf32> to vector<1x4x256xf32>
    %27 = vector.shape_cast %24 : vector<1x4x256xf32> to vector<1x1x4x256xf32>
    tpu.vector_store %arg7[%c0_18, %c2_19, %c0_20, %c0_21], %27 {strides = array<i32>} : memref<1x3x4x256xf32, #tpu.memory_space<vmem>>, vector<1x1x4x256xf32>,
    return
  }
  func.func @transform_0(%arg0: i32, %arg1: i32, %arg2: i32) -> i32 {
    %c0_i32 = arith.constant 0 : i32
    %c0_i32_0 = arith.constant 0 : i32
    return %c0_i32 : i32
  }
  func.func @transform_1(%arg0: i32, %arg1: i32, %arg2: i32) -> (i32, i32, i32) {
    %c0_i32 = arith.constant 0 : i32
    return %arg0, %arg1, %arg2 : i32, i32, i32
  }
  func.func @transform_2(%arg0: i32, %arg1: i32, %arg2: i32) -> (i32, i32, i32) {
    %c0_i32 = arith.constant 0 : i32
    return %arg0, %arg1, %arg2 : i32, i32, i32
  }
  func.func @transform_3(%arg0: i32, %arg1: i32, %arg2: i32) -> (i32, i32, i32) {
    %c0_i32 = arith.constant 0 : i32
    return %arg0, %arg1, %arg2 : i32, i32, i32
  }
  func.func @transform_4(%arg0: i32, %arg1: i32, %arg2: i32) -> (i32, i32, i32, i32) {
    %c0_i32 = arith.constant 0 : i32
    %c0_i32_0 = arith.constant 0 : i32
    return %arg0, %c0_i32, %arg1, %arg2 : i32, i32, i32, i32
  }
}

</mosaic_0001>

<llo_original>
// kernel: tpu_custom_call.1
$region0: #{tpu_custom_call.1}
  #allocation0 [shape = 'u32[]', space=smem, size = 0x4, offset = 0x4, fixed_abs, tag = 'smem constant byte address 0x4 - core index']
  #allocation1 [shape = 'u32[72,128]{1,0:T(1,128)}', space=vmem, size = 0x9000, scoped, tag = 'internal scratch']
  %s0 = inlined_call_operand.hbm [shape: f32[3], index: 0, kind: input, shape index: {}]
  %s1 = inlined_call_operand.hbm [shape: f32[2,4,256], index: 1, kind: input, shape index: {}]
  %s2 = inlined_call_operand.hbm [shape: f32[2,4,256], index: 2, kind: input, shape index: {}]
  %s3 = inlined_call_operand.hbm [shape: f32[2,4,256], index: 3, kind: input, shape index: {}]
  %s4 = inlined_call_operand.hbm [shape: f32[2,3,4,256], index: 4, kind: output, shape index: {}]
  %s5 = sld [smem:[#allocation0]]
  $region65: #{tpu_custom_call.1} parent=0
    _
  %s7 = ssub.s32 1, %s5
  %s8 = scalar_select 0, %s7, %s5
  $region1: #{tpu_custom_call.1} parent=0
    #allocation2 [shape = 'u8[512]{0}', space=smem, size = 0x200, scoped, tag = 'input window, operand 0, single buffered']
    #allocation3 [shape = 's32[2]{0}', space=sflag, size = 0x8, scoped, tag = 'scoped memory for tpu_custom_call.1']
    #allocation4 [shape = 's32[2]{0}', space=sflag, size = 0x8, scoped, tag = 'scoped memory for tpu_custom_call.1']
    #allocation5 [shape = 's32[2]{0}', space=sflag, size = 0x8, scoped, tag = 'scoped memory for tpu_custom_call.1']
    #allocation6 [shape = 'u8[8192]{0}', space=vmem, size = 0x2000, scoped, tag = 'input window, operand 1']
    #allocation7 [shape = 'u8[8192]{0}', space=vmem, size = 0x2000, scoped, tag = 'input window, operand 2']
    #allocation8 [shape = 's32[2]{0}', space=sflag, size = 0x8, scoped, tag = 'scoped memory for tpu_custom_call.1']
    #allocation9 [shape = 'u8[8192]{0}', space=vmem, size = 0x2000, scoped, tag = 'input window, operand 3']
    #allocation10 [shape = 'u8[24576]{0}', space=vmem, size = 0x6000, scoped, tag = 'output window, operand 0']
    %9 = vsyncpa [#allocation5], 0
    %10 = vsyncpa [#allocation3], 0
    %s11 = scalar_lea.sflag [#allocation3], 1
    %12 = vsyncpa %s11, 0
    %13 = vsyncpa [#allocation8], 0
    %s14 = scalar_lea.sflag [#allocation8], 1
    %15 = vsyncpa %s14, 0
    %16 = vsyncpa [#allocation4], 0
    %s17 = scalar_lea.sflag [#allocation4], 1
    %18 = vsyncpa %s17, 0
    loop: start=0, step=1, limit=4
    $region2: #{tpu_custom_call.1} parent=1 // loop_pre_header
      _
    $region3: #{tpu_custom_call.1} parent=1 // loop_header
      %s20 = sphi 0, %s24
      %p21 = scmp.ge.s32.totalorder %s20, 4
      %s27 = sphi 0, %s46
      %s28 = sphi 0, %s42
      %s29 = sphi 0, %s38
      %s30 = sphi 0, %s27
      %s31 = sphi 0, %s28
      %s32 = sphi 0, %s29
      %s33 = sphi 0, %s30
      %s34 = sphi 0, %s31
      %s35 = sphi 0, %s32
      %s47 = sphi 0, %s47
      %s49 = sphi 0, %s47
      %s50 = sphi 0, %s49
      %s64 = sphi 0, %s50
      %s74 = sphi 0, %s76
      %s77 = sphi 0, %s74
      %s78 = sphi 0, %s77
      %s94 = sphi 0, %s78
      %s104 = sphi 0, %s106
      %s107 = sphi 0, %s104
      %s108 = sphi 0, %s107
      %s124 = sphi 0, %s108
      %s134 = sphi 0, %s136
      %s137 = sphi 0, %s134
      %s138 = sphi 0, %s137
      %s154 = sphi 0, %s138
      %s164 = sphi 0, %s166
      %s167 = sphi 0, %s164
      %s168 = sphi 0, %s167
      %s184 = sphi 0, %s168
    $region4: #{tpu_custom_call.1} parent=1 // loop_header_branch
      %23 = sbr.rel (%p21) target = $region8
    $region5: #{tpu_custom_call.1} parent=1 // loop_body
      %s25 = ssub.s32 %s20, 1
      %s26 = ssub.s32 %s20, 2
      %s36 = sadd.s32 1, %s29
      %p37 = scmp.ge.s32.totalorder %s36, 1
      %s38 = scalar_select %p37, 0, %s36
      %s39 = sadd.s32 1, %s28
      %s40 = scalar_select %p37, %s39, %s28
      %p41 = scmp.ge.s32.totalorder %s40, 1
      %s42 = scalar_select %p41, 0, %s40
      %s43 = sadd.s32 1, %s27
      %s44 = scalar_select %p41, %s43, %s27
      %p45 = scmp.ge.s32.totalorder %s44, 2
      %s46 = scalar_select %p45, 0, %s44
      %s48 = sadd.s32 %s47, 1
      %p51 = scmp.eq.s32.totalorder %s20, 1
      %p52 = scmp.ne.s32.totalorder %s47, %s49
      %p53 = scmp.eq.s32.totalorder %s20, 0
      %p54 = por %p52, %p53
      %p55 = scmp.ne.s32.totalorder %s47, %s49
      %p56 = scmp.eq.s32.totalorder %s25, 1
      %p57 = por %p55, %p56
      %p58 = scmp.ne.s32.totalorder %s49, %s50
      %p59 = scmp.eq.s32.totalorder %s25, 0
      %p60 = por %p58, %p59
      %p61 = scmp.ne.s32.totalorder %s49, %s50
      %p62 = scmp.eq.s32.totalorder %s26, 1
      %p63 = por %p61, %p62
      %p65 = scmp.ne.s32.totalorder %s50, %s64
      %p66 = scmp.eq.s32.totalorder %s26, 0
      %p67 = por %p65, %p66
      %s68 = ssub.s32 %s27, %s46
      %s69 = ssub.s32 %s28, %s42
      %s70 = sor.u32 %s68, %s69
      %s71 = ssub.s32 %s29, %s38
      %s72 = sor.u32 %s70, %s71
      %p73 = scmp.eq.s32.totalorder %s72, 0
      %s75 = sadd.s32 %s74, 1
      %s76 = scalar_select %p73, %s74, %s75
      %p79 = pneg %p73
      %p80 = scmp.eq.s32.totalorder %s20, 1
      %p81 = por %p79, %p80
      %p82 = scmp.ne.s32.totalorder %s74, %s77
      %p83 = scmp.eq.s32.totalorder %s20, 0
      %p84 = por %p82, %p83
      %p85 = scmp.ne.s32.totalorder %s74, %s77
      %p86 = scmp.eq.s32.totalorder %s25, 1
      %p87 = por %p85, %p86
      %p88 = scmp.ne.s32.totalorder %s77, %s78
      %p89 = scmp.eq.s32.totalorder %s25, 0
      %p90 = por %p88, %p89
      %p91 = scmp.ne.s32.totalorder %s77, %s78
      %p92 = scmp.eq.s32.totalorder %s26, 1
      %p93 = por %p91, %p92
      %p95 = scmp.ne.s32.totalorder %s78, %s94
      %p96 = scmp.eq.s32.totalorder %s26, 0
      %p97 = por %p95, %p96
      %s98 = ssub.s32 %s27, %s46
      %s99 = ssub.s32 %s28, %s42
      %s100 = sor.u32 %s98, %s99
      %s101 = ssub.s32 %s29, %s38
      %s102 = sor.u32 %s100, %s101
      %p103 = scmp.eq.s32.totalorder %s102, 0
      %s105 = sadd.s32 %s104, 1
      %s106 = scalar_select %p103, %s104, %s105
      %p109 = pneg %p103
      %p110 = scmp.eq.s32.totalorder %s20, 1
      %p111 = por %p109, %p110
      %p112 = scmp.ne.s32.totalorder %s104, %s107
      %p113 = scmp.eq.s32.totalorder %s20, 0
      %p114 = por %p112, %p113
      %p115 = scmp.ne.s32.totalorder %s104, %s107
      %p116 = scmp.eq.s32.totalorder %s25, 1
      %p117 = por %p115, %p116
      %p118 = scmp.ne.s32.totalorder %s107, %s108
      %p119 = scmp.eq.s32.totalorder %s25, 0
      %p120 = por %p118, %p119
      %p121 = scmp.ne.s32.totalorder %s107, %s108
      %p122 = scmp.eq.s32.totalorder %s26, 1
      %p123 = por %p121, %p122
      %p125 = scmp.ne.s32.totalorder %s108, %s124
      %p126 = scmp.eq.s32.totalorder %s26, 0
      %p127 = por %p125, %p126
      %s128 = ssub.s32 %s27, %s46
      %s129 = ssub.s32 %s28, %s42
      %s130 = sor.u32 %s128, %s129
      %s131 = ssub.s32 %s29, %s38
      %s132 = sor.u32 %s130, %s131
      %p133 = scmp.eq.s32.totalorder %s132, 0
      %s135 = sadd.s32 %s134, 1
      %s136 = scalar_select %p133, %s134, %s135
      %p139 = pneg %p133
      %p140 = scmp.eq.s32.totalorder %s20, 1
      %p141 = por %p139, %p140
      %p142 = scmp.ne.s32.totalorder %s134, %s137
      %p143 = scmp.eq.s32.totalorder %s20, 0
      %p144 = por %p142, %p143
      %p145 = scmp.ne.s32.totalorder %s134, %s137
      %p146 = scmp.eq.s32.totalorder %s25, 1
      %p147 = por %p145, %p146
      %p148 = scmp.ne.s32.totalorder %s137, %s138
      %p149 = scmp.eq.s32.totalorder %s25, 0
      %p150 = por %p148, %p149
      %p151 = scmp.ne.s32.totalorder %s137, %s138
      %p152 = scmp.eq.s32.totalorder %s26, 1
      %p153 = por %p151, %p152
      %p155 = scmp.ne.s32.totalorder %s138, %s154
      %p156 = scmp.eq.s32.totalorder %s26, 0
      %p157 = por %p155, %p156
      %s158 = ssub.s32 %s27, %s46
      %s159 = ssub.s32 %s28, %s42
      %s160 = sor.u32 %s158, %s159
      %s161 = ssub.s32 %s29, %s38
      %s162 = sor.u32 %s160, %s161
      %p163 = scmp.eq.s32.totalorder %s162, 0
      %s165 = sadd.s32 %s164, 1
      %s166 = scalar_select %p163, %s164, %s165
      %p169 = pneg %p163
      %p170 = scmp.eq.s32.totalorder %s20, 1
      %p171 = por %p169, %p170
      %p172 = scmp.ne.s32.totalorder %s164, %s167
      %p173 = scmp.eq.s32.totalorder %s20, 0
      %p174 = por %p172, %p173
      %p175 = scmp.ne.s32.totalorder %s164, %s167
      %p176 = scmp.eq.s32.totalorder %s25, 1
      %p177 = por %p175, %p176
      %p178 = scmp.ne.s32.totalorder %s167, %s168
      %p179 = scmp.eq.s32.totalorder %s25, 0
      %p180 = por %p178, %p179
      %p181 = scmp.ne.s32.totalorder %s167, %s168
      %p182 = scmp.eq.s32.totalorder %s26, 1
      %p183 = por %p181, %p182
      %p185 = scmp.ne.s32.totalorder %s168, %s184
      %p186 = scmp.eq.s32.totalorder %s26, 0
      %p187 = por %p185, %p186
      %p188 = scmp.le.s32.totalorder 1, %s20
      %p189 = scmp.lt.s32.totalorder %s20, 3
      %p190 = pnand %p188, %p189
      %p191 = pneg %p190
      // Predicated region
      $region9: #{tpu_custom_call.1} parent=5 // pred_check
        _
      $region10: #{tpu_custom_call.1} parent=5 // pred_check_branch
        %193 = sbr.rel (%p190) target = $region12
      $region11: #{tpu_custom_call.1} parent=5 // pred_region
        %s194 = ssub.s32 %s20, 1
        // Predicated region
        $region13: #{tpu_custom_call.1} parent=11 // pred_check
          %p195 = pneg %p60
        $region14: #{tpu_custom_call.1} parent=11 // pred_check_branch
          %197 = sbr.rel (%p195) target = $region16
        $region15: #{tpu_custom_call.1} parent=11 // pred_region
          %199 = vsyncadd [#allocation5], 0
          %s201 = sshll.u32 %s0, 4
          %s202 = int_to_ptr.hbm [resolvable:$true] %s201
          %204 = dma.hbm_to_smem %s202, 16, [#allocation2], [#allocation5]
        $region16: #{tpu_custom_call.1} parent=11 // pred_fallthru
          _
      $region12: #{tpu_custom_call.1} parent=5 // pred_fallthru
        _
      %p205 = scmp.lt.s32.totalorder %s20, 2
      // Predicated region
      $region17: #{tpu_custom_call.1} parent=5 // pred_check
        %p206 = pneg %p205
      $region18: #{tpu_custom_call.1} parent=5 // pred_check_branch
        %208 = sbr.rel (%p206) target = $region20
      $region19: #{tpu_custom_call.1} parent=5 // pred_region
        // Predicated region
        $region21: #{tpu_custom_call.1} parent=19 // pred_check
          %p209 = pneg %p84
        $region22: #{tpu_custom_call.1} parent=19 // pred_check_branch
          %211 = sbr.rel (%p209) target = $region24
        $region23: #{tpu_custom_call.1} parent=19 // pred_region
          %s212 = sand.u32 %s74, 1
          %s213 = scalar_lea.sflag [#allocation3], %s212
          %s214 = sand.u32 %s74, 1
          %s215 = smul.addr %s214, 8
          %s216 = scalar_lea.vmem [#allocation6], %s215
          %s217 = smul.u32 2, %s29
          %219 = vsyncadd %s213, 0
          %s220 = smul.addr %s28, 2
          %s221 = sadd.s32 %s217, %s220
          %s222 = smul.addr %s27, 2
          %s223 = sadd.s32 %s221, %s222
          %s224 = smul.addr %s223, 4
          %s225 = scalar_lea.hbm %s1, %s224
          %s227 = sshll.u32 %s225, 4
          %s228 = int_to_ptr.hbm [resolvable:$true] %s227
          %s229 = sshll.u32 %s216, 4
          %s230 = int_to_ptr.vmem [resolvable:$true] %s229
          %232 = dma.hbm_to_vmem [thread:$0]  %s228, 128, %s230, %s213
        $region24: #{tpu_custom_call.1} parent=19 // pred_fallthru
          _
        // Predicated region
        $region25: #{tpu_custom_call.1} parent=19 // pred_check
          %p233 = pneg %p114
        $region26: #{tpu_custom_call.1} parent=19 // pred_check_branch
          %235 = sbr.rel (%p233) target = $region28
        $region27: #{tpu_custom_call.1} parent=19 // pred_region
          %s236 = sand.u32 %s20, 1
          %s237 = scalar_lea.sflag [#allocation8], %s236
          %s238 = sand.u32 %s104, 1
          %s239 = smul.addr %s238, 8
          %s240 = scalar_lea.vmem [#allocation7], %s239
          %s241 = smul.u32 2, %s29
          %243 = vsyncadd %s237, 0
          %s244 = smul.addr %s28, 2
          %s245 = sadd.s32 %s241, %s244
          %s246 = smul.addr %s27, 2
          %s247 = sadd.s32 %s245, %s246
          %s248 = smul.addr %s247, 4
          %s249 = scalar_lea.hbm %s2, %s248
          %s251 = sshll.u32 %s249, 4
          %s252 = int_to_ptr.hbm [resolvable:$true] %s251
          %s253 = sshll.u32 %s240, 4
          %s254 = int_to_ptr.vmem [resolvable:$true] %s253
          %256 = dma.hbm_to_vmem [thread:$0]  %s252, 128, %s254, %s237
        $region28: #{tpu_custom_call.1} parent=19 // pred_fallthru
          _
        // Predicated region
        $region29: #{tpu_custom_call.1} parent=19 // pred_check
          %p257 = pneg %p144
        $region30: #{tpu_custom_call.1} parent=19 // pred_check_branch
          %259 = sbr.rel (%p257) target = $region32
        $region31: #{tpu_custom_call.1} parent=19 // pred_region
          %s260 = sand.u32 %s20, 1
          %s261 = scalar_lea.sflag [#allocation8], %s260
          %s262 = sand.u32 %s134, 1
          %s263 = smul.addr %s262, 8
          %s264 = scalar_lea.vmem [#allocation9], %s263
          %s265 = smul.u32 2, %s29
          %267 = vsyncadd %s261, 0
          %s268 = smul.addr %s28, 2
          %s269 = sadd.s32 %s265, %s268
          %s270 = smul.addr %s27, 2
          %s271 = sadd.s32 %s269, %s270
          %s272 = smul.addr %s271, 4
          %s273 = scalar_lea.hbm %s3, %s272
          %s275 = sshll.u32 %s273, 4
          %s276 = int_to_ptr.hbm [resolvable:$true] %s275
          %s277 = sshll.u32 %s264, 4
          %s278 = int_to_ptr.vmem [resolvable:$true] %s277
          %280 = dma.hbm_to_vmem [thread:$0]  %s276, 128, %s278, %s261
        $region32: #{tpu_custom_call.1} parent=19 // pred_fallthru
          _
      $region20: #{tpu_custom_call.1} parent=5 // pred_fallthru
        _
      %p281 = scmp.le.s32.totalorder 1, %s20
      %p282 = scmp.lt.s32.totalorder %s20, 3
      %p283 = pnand %p281, %p282
      %p284 = pneg %p283
      // Predicated region
      $region33: #{tpu_custom_call.1} parent=5 // pred_check
        _
      $region34: #{tpu_custom_call.1} parent=5 // pred_check_branch
        %286 = sbr.rel (%p283) target = $region36
      $region35: #{tpu_custom_call.1} parent=5 // pred_region
        %s287 = ssub.s32 %s20, 1
        // Predicated region
        $region37: #{tpu_custom_call.1} parent=35 // pred_check
          %p288 = pneg %p60
        $region38: #{tpu_custom_call.1} parent=35 // pred_check_branch
          %290 = sbr.rel (%p288) target = $region40
        $region39: #{tpu_custom_call.1} parent=35 // pred_region
          %292 = dma.done [#allocation5], 16
        $region40: #{tpu_custom_call.1} parent=35 // pred_fallthru
          _
        %s293 = sand.u32 %s77, 1
        %s294 = scalar_lea.sflag [#allocation3], %s293
        %s295 = sand.u32 %s77, 1
        %s296 = smul.addr %s295, 8
        %s297 = scalar_lea.vmem [#allocation6], %s296
        // Predicated region
        $region41: #{tpu_custom_call.1} parent=35 // pred_check
          %p298 = pneg %p90
        $region42: #{tpu_custom_call.1} parent=35 // pred_check_branch
          %300 = sbr.rel (%p298) target = $region44
        $region43: #{tpu_custom_call.1} parent=35 // pred_region
          %302 = dma.done %s294, 128
        $region44: #{tpu_custom_call.1} parent=35 // pred_fallthru
          _
        %s303 = sand.u32 %s25, 1
        %s304 = scalar_lea.sflag [#allocation8], %s303
        %s305 = sand.u32 %s107, 1
        %s306 = smul.addr %s305, 8
        %s307 = scalar_lea.vmem [#allocation7], %s306
        // Predicated region
        $region45: #{tpu_custom_call.1} parent=35 // pred_check
          %p308 = pneg %p120
        $region46: #{tpu_custom_call.1} parent=35 // pred_check_branch
          %310 = sbr.rel (%p308) target = $region48
        $region47: #{tpu_custom_call.1} parent=35 // pred_region
          %312 = dma.done %s304, 128
        $region48: #{tpu_custom_call.1} parent=35 // pred_fallthru
          _
        %s313 = sand.u32 %s25, 1
        %s314 = scalar_lea.sflag [#allocation8], %s313
        %s315 = sand.u32 %s137, 1
        %s316 = smul.addr %s315, 8
        %s317 = scalar_lea.vmem [#allocation9], %s316
        // Predicated region
        $region49: #{tpu_custom_call.1} parent=35 // pred_check
          %p318 = pneg %p150
        $region50: #{tpu_custom_call.1} parent=35 // pred_check_branch
          %320 = sbr.rel (%p318) target = $region52
        $region51: #{tpu_custom_call.1} parent=35 // pred_region
          %322 = dma.done %s314, 128
        $region52: #{tpu_custom_call.1} parent=35 // pred_fallthru
          _
        %323 = sfence
        %p324 = pneg %p60
        %p325 = pneg %p57
        %s326 = sand.u32 %s77, 1
        %s327 = scalar_lea.sflag [#allocation3], %s326
        %s328 = sand.u32 %s77, 1
        %s329 = smul.addr %s328, 8
        %s330 = scalar_lea.vmem [#allocation6], %s329
        %p331 = pneg %p90
        %p332 = pneg %p87
        %s333 = sand.u32 %s25, 1
        %s334 = scalar_lea.sflag [#allocation8], %s333
        %s335 = sand.u32 %s107, 1
        %s336 = smul.addr %s335, 8
        %s337 = scalar_lea.vmem [#allocation7], %s336
        %p338 = pneg %p120
        %p339 = pneg %p117
        %s340 = sand.u32 %s25, 1
        %s341 = scalar_lea.sflag [#allocation8], %s340
        %s342 = sand.u32 %s137, 1
        %s343 = smul.addr %s342, 8
        %s344 = scalar_lea.vmem [#allocation9], %s343
        %p345 = pneg %p150
        %p346 = pneg %p147
        %p347 = pneg %p180
        %p348 = pneg %p177
        %s349 = sand.u32 %s167, 1
        %s350 = scalar_lea.sflag [#allocation4], %s349
        %s351 = sand.u32 %s167, 1
        %s352 = smul.addr %s351, 24
        %s353 = scalar_lea.vmem [#allocation10], %s352
        %s354 = smul.u32 2, %s32
        %s355 = smul.u32 2, %s32
        %s356 = smul.u32 2, %s32
        %s357 = smul.u32 2, %s32
        %s358 = sld [smem:[#allocation2]]
        %s359 = sld [smem:[#allocation2 + $0x1]]
        %s360 = sld [smem:[#allocation2 + $0x2]]
        %s361 = sadd.f32 %s358, %s359
        %s362 = sadd.f32 %s361, %s360
        %s363 = sadd.f32 %s362, 0.0001
        %v364 = vstv %s363
        %v365 = vrcp.pop %v364
        %v366 = vmul.f32 %v364, %v365
        %v367 = vsub.f32 1.0, %v366
        %v368 = vmul.f32 %v365, %v367
        %v369 = vadd.f32 %v365, %v368
        %vm370 = vweird.f32 %v364
        %vm371 = vweird.f32 %v365
        %vm372 = vmor %vm370, %vm371
        %v373 = vsel %vm372, %v365, %v369
        %v374 = vand.u32 2147483647, %v364
        %vm375 = vcmp.eq.f32.partialorder %v374, 8.507059e+37
        %v376 = vand.u32 %v364, 2147483648
        %v377 = vor.u32 1.1754944e-38, %v376
        %v378 = vsel %vm375, %v377, %v373
        %s379 = vtos %v378
        %s380 = smul.f32 %s358, %s379
        %s381 = smul.f32 %s359, %s379
        %s382 = smul.f32 %s360, %s379
        %v383 = vld [vmem:[%s297] sm:$0xff]
        %v384 = vstv %s380
        %v385 = vmul.f32 %v384, %v383
        %386 = vst [vmem:[%s353] sm:$0xff] %v385
        %v387 = vld [vmem:[%s307] sm:$0xff]
        %v388 = vstv %s381
        %v389 = vmul.f32 %v388, %v387
        %s390 = scalar_lea.vmem %s353, 8 [#allocation10]
        %391 = vst [vmem:[%s390] sm:$0xff] %v389
        %v392 = vld [vmem:[%s317] sm:$0xff]
        %v393 = vstv %s382
        %v394 = vmul.f32 %v393, %v392
        %s395 = scalar_lea.vmem %s353, 16 [#allocation10]
        %396 = vst [vmem:[%s395] sm:$0xff] %v394
        %s397 = sand.u32 %s167, 1
        %s398 = scalar_lea.sflag [#allocation4], %s397
        %s399 = sand.u32 %s167, 1
        %s400 = smul.addr %s399, 24
        %s401 = scalar_lea.vmem [#allocation10], %s400
        // Predicated region
        $region53: #{tpu_custom_call.1} parent=35 // pred_check
          %p402 = pneg %p177
        $region54: #{tpu_custom_call.1} parent=35 // pred_check_branch
          %404 = sbr.rel (%p402) target = $region56
        $region55: #{tpu_custom_call.1} parent=35 // pred_region
          %s405 = smul.u32 2, %s32
          %407 = vsyncadd %s398, 0
          %s408 = smul.addr %s31, 2
          %s409 = sadd.s32 %s405, %s408
          %s410 = smul.addr %s30, 6
          %s411 = sadd.s32 %s409, %s410
          %s412 = smul.addr %s411, 4
          %s413 = scalar_lea.hbm %s4, %s412
          %s414 = sshll.u32 %s401, 4
          %s415 = int_to_ptr.vmem [resolvable:$true] %s414
          %s416 = sshll.u32 %s413, 4
          %s417 = int_to_ptr.hbm [resolvable:$true] %s416
          %422 = dma.vmem_to_hbm [thread:$0]  %s415, 384, %s417, %s398, 128, 128, 8
        $region56: #{tpu_custom_call.1} parent=35 // pred_fallthru
          _
      $region36: #{tpu_custom_call.1} parent=5 // pred_fallthru
        _
      %p423 = scmp.le.s32.totalorder 2, %s20
      // Predicated region
      $region57: #{tpu_custom_call.1} parent=5 // pred_check
        %p424 = pneg %p423
      $region58: #{tpu_custom_call.1} parent=5 // pred_check_branch
        %426 = sbr.rel (%p424) target = $region60
      $region59: #{tpu_custom_call.1} parent=5 // pred_region
        %s427 = ssub.s32 %s20, 2
        // Predicated region
        $region61: #{tpu_custom_call.1} parent=59 // pred_check
          %p428 = pneg %p183
        $region62: #{tpu_custom_call.1} parent=59 // pred_check_branch
          %430 = sbr.rel (%p428) target = $region64
        $region63: #{tpu_custom_call.1} parent=59 // pred_region
          %s431 = sand.u32 %s168, 1
          %s432 = scalar_lea.sflag [#allocation4], %s431
          %s433 = sand.u32 %s168, 1
          %s434 = smul.addr %s433, 24
          %s435 = scalar_lea.vmem [#allocation10], %s434
          %437 = dma.done %s432, 384
        $region64: #{tpu_custom_call.1} parent=59 // pred_fallthru
          _
      $region60: #{tpu_custom_call.1} parent=5 // pred_fallthru
        _
    $region6: #{tpu_custom_call.1} parent=1 // loop_footer
      %s24 = sadd.s32 1, %s20
    $region7: #{tpu_custom_call.1} parent=1 // loop_footer_branch
      %19 = sbr.rel target = $region3
    $region8: #{tpu_custom_call.1} parent=1 // loop_exit
      _
    %438 = vsyncpa [#allocation3], 1
    %s439 = scalar_lea.sflag [#allocation3], 1
    %440 = vsyncpa %s439, 1
    %441 = vsyncpa [#allocation8], 1
    %s442 = scalar_lea.sflag [#allocation8], 1
    %443 = vsyncpa %s442, 1
    %444 = vsyncpa [#allocation4], 1
    %s445 = scalar_lea.sflag [#allocation4], 1
    %446 = vsyncpa %s445, 1
    %447 = vsyncpa [#allocation5], 1
    %s448 = scalar_lea.sflag [#allocation5], 1
    %449 = vsyncpa %s448, 1

</llo_original>
